<compile_context>
chip_gen: v5e
topology: v5e:2x2
jax: 0.10.0
libtpu: 0.0.40
codegen_flags: <defaults>
</compile_context>

<pallas_src>
import functools
import math

import numpy as np
import jax
import jax.numpy as jnp
from jax.experimental import pallas as pl
from jax.experimental.pallas import tpu as pltpu


def _round_up(x, m):
    return (x + m - 1) // m * m


def _vmem_capacity_bytes():
    try:
        info = pltpu.get_tpu_info()
        return int(getattr(info, "vmem_capacity_bytes", 64 * 1024 * 1024))
    except Exception:
        return 64 * 1024 * 1024  # conservative default (v7x per-TC VMEM)


def _choose_row_tile(n_pad, f_in, f_out_pad, in_itemsize, budget_bytes):
    """Largest power-of-two row tile (multiple of 8, divides n_pad, <= 1024)
    whose double-buffered working set fits the VMEM budget."""
    best = min(8, n_pad)
    tm = 8
    while tm <= min(n_pad, 1024):
        if n_pad % tm == 0:
            need = (in_itemsize * (2 * tm * n_pad        # adj tile, 2 buffers
                                   + 2 * n_pad * f_in)   # resident x, 2 buffers
                    + 4 * 2 * tm * f_out_pad)            # f32 out tile, 2 buffers
            if need <= budget_bytes:
                best = tm
        tm *= 2
    return best


# ---------------------------------------------------------------------------
# Kernel.  Grid = (B, N_pad // TM).  Keyword args are trace-time constants.
# ---------------------------------------------------------------------------
def _gcn_row_kernel(adj_ref, x_ref, w_ref, b_ref, out_ref, *,
                    tm, f_in, has_self, reassociate):
    # adj_ref: (1, TM, Np)      x_ref: (1, Np, F_in)
    # w_ref:   (F_in, Fp)  or  (2*F_in, Fp) rows = [Wn^T ; Ws^T] when has_self
    # b_ref:   (1, Fp)          out_ref: (1, TM, Fp)
    adj_t = adj_ref[0]                        # (TM, Np)   compute dtype
    x_all = x_ref[0]                          # (Np, F_in)
    cdt = x_all.dtype

    if has_self:
        row0 = pl.multiple_of(pl.program_id(1) * tm, tm)
        x_tile = x_ref[0, pl.ds(row0, tm), :]             # (TM, F_in)

    if not reassociate:
        # (adj @ x) @ W  -- preferred when F_out_pad >= F_in.
        ax = jnp.dot(adj_t, x_all, preferred_element_type=jnp.float32)  # (TM,F_in) f32
        if has_self:
            # Single fat MXU call: [ax | x_tile] @ [Wn^T ; Ws^T].
            lhs = jnp.concatenate([ax.astype(cdt), x_tile], axis=-1)    # (TM, 2F_in)
            out = jnp.dot(lhs, w_ref[...], preferred_element_type=jnp.float32)
        else:
            out = jnp.dot(ax.astype(cdt), w_ref[...],
                          preferred_element_type=jnp.float32)
    else:
        # adj @ (x @ Wn)  -- smaller intermediate when F_out_pad < F_in.
        w = w_ref[...]
        wn = w[:f_in] if has_self else w
        xw = jnp.dot(x_all, wn, preferred_element_type=jnp.float32)     # (Np, Fp)
        out = jnp.dot(adj_t, xw.astype(cdt), preferred_element_type=jnp.float32)
        if has_self:
            out = out + jnp.dot(x_tile, w[f_in:],
                                preferred_element_type=jnp.float32)

    out = out + b_ref[...]                    # f32 bias broadcast over rows
    out_ref[0] = out.astype(out_ref.dtype)


# ---------------------------------------------------------------------------
# Wrapper
# ---------------------------------------------------------------------------
def batch_gcn_conv(x, adj, w_neigh, b_neigh, w_self=None,
                   compute_dtype=jnp.bfloat16):
    """x: [B,N,F_in], adj: [B,N,N], w_neigh: [F_out,F_in] (torch layout),
    b_neigh: [F_out], w_self: optional [F_out,F_in].  Returns [B,N,F_out]."""
    B, N, F_in = x.shape
    F_out = w_neigh.shape[0]
    out_dtype = x.dtype
    has_self = w_self is not None

    # Padding: lane-dense output (F_out -> multiple of 128), sublane-even N.
    N_pad = _round_up(N, 8)
    F_out_pad = _round_up(F_out, 128)

    # Glue: transpose / cast / pad weights; stack Wn^T and Ws^T for one MXU call.
    wn_t = jnp.transpose(w_neigh).astype(compute_dtype)            # (F_in, F_out)
    if has_self:
        ws_t = jnp.transpose(w_self).astype(compute_dtype)
        w_cat = jnp.concatenate([wn_t, ws_t], axis=0)              # (2F_in, F_out)
    else:
        w_cat = wn_t
    w_cat = jnp.pad(w_cat, ((0, 0), (0, F_out_pad - F_out)))
    bias = jnp.pad(b_neigh.astype(jnp.float32).reshape(1, F_out),
                   ((0, 0), (0, F_out_pad - F_out)))

    x_c = jnp.pad(x.astype(compute_dtype), ((0, 0), (0, N_pad - N), (0, 0)))
    adj_c = jnp.pad(adj.astype(compute_dtype),
                    ((0, 0), (0, N_pad - N), (0, N_pad - N)))

    # Per-generation tile sizing / VMEM budget.
    vmem_cap = _vmem_capacity_bytes()
    in_itemsize = np.dtype(compute_dtype).itemsize
    TM = _choose_row_tile(N_pad, F_in, F_out_pad, in_itemsize,
                          budget_bytes=int(vmem_cap * 0.6))
    grid = (B, N_pad // TM)

    f_in_eff = 2 * F_in if has_self else F_in
    reassociate = F_out_pad < F_in

    kernel = functools.partial(_gcn_row_kernel, tm=TM, f_in=F_in,
                               has_self=has_self, reassociate=reassociate)

    cost = pl.CostEstimate(
        flops=2 * B * N_pad * N_pad * F_in
              + 2 * B * N_pad * f_in_eff * F_out_pad,
        transcendentals=0,
        bytes_accessed=(adj_c.size * in_itemsize
                        + x_c.size * in_itemsize * grid[1]
                        + w_cat.size * in_itemsize
                        + B * N_pad * F_out_pad * np.dtype(out_dtype).itemsize),
    )

    out = pl.pallas_call(
        kernel,
        out_shape=jax.ShapeDtypeStruct((B, N_pad, F_out_pad), out_dtype),
        grid_spec=pltpu.PrefetchScalarGridSpec(
            num_scalar_prefetch=0,
            grid=grid,
            in_specs=[
                pl.BlockSpec((1, TM, N_pad), lambda b, m: (b, m, 0)),      # adj row tile
                pl.BlockSpec((1, N_pad, F_in), lambda b, m: (b, 0, 0)),    # x (per batch)
                pl.BlockSpec((f_in_eff, F_out_pad), lambda b, m: (0, 0)),  # weights (const)
                pl.BlockSpec((1, F_out_pad), lambda b, m: (0, 0)),         # bias (const)
            ],
            out_specs=pl.BlockSpec((1, TM, F_out_pad), lambda b, m: (b, m, 0)),
        ),
        compiler_params=pltpu.CompilerParams(
            dimension_semantics=("parallel", "parallel"),
            vmem_limit_bytes=int(vmem_cap * 0.75),
        ),
        cost_estimate=cost,
    )(adj_c, x_c, w_cat, bias)

    return out[:, :N, :F_out]


# ---------------------------------------------------------------------------
# Deterministic parameter init (mimics nn.Linear.reset_parameters bounds)
# ---------------------------------------------------------------------------
def init_linear_params(key, in_features, out_features, bias=True):
    kw, kb = jax.random.split(key)
    bound = 1.0 / math.sqrt(in_features)   # kaiming_uniform(a=sqrt(5)) bound
    w = jax.random.uniform(kw, (out_features, in_features),
                           minval=-bound, maxval=bound, dtype=jnp.float32)
    if bias:
        b = jax.random.uniform(kb, (out_features,),
                               minval=-bound, maxval=bound, dtype=jnp.float32)
    else:
        b = jnp.zeros((out_features,), jnp.float32)
    return w, b


def reference_forward(x, adj, w_neigh, b_neigh, w_self=None):
    ax = jnp.einsum("bij,bjf->bif", adj, x)
    out = jnp.einsum("bif,of->bio", ax, w_neigh) + b_neigh
    if w_self is not None:
        out = out + jnp.einsum("bif,of->bio", x, w_self)
    return out


if __name__ == "__main__":
    key = jax.random.PRNGKey(0)
    k_x, k_adj, k_wn, k_ws = jax.random.split(key, 4)

    B, N, F_in, F_out = 2, 8, 16, 32
    x = jax.random.normal(k_x, (B, N, F_in), dtype=jnp.float32)
    adj = jax.random.normal(k_adj, (B, N, N), dtype=jnp.float32)
    w_neigh, b_neigh = init_linear_params(k_wn, F_in, F_out, bias=True)
    w_self, _ = init_linear_params(k_ws, F_in, F_out, bias=False)

    # --- strict check with f32 compute (comparable to the XLA reference) ----
    ref_gcn = reference_forward(x, adj, w_neigh, b_neigh)
    out_f32 = jax.block_until_ready(
        batch_gcn_conv(x, adj, w_neigh, b_neigh, compute_dtype=jnp.float32))
    assert out_f32.shape == (B, N, F_out)
    assert jnp.allclose(out_f32, ref_gcn, atol=1e-4, rtol=1e-4)

    ref_self = reference_forward(x, adj, w_neigh, b_neigh, w_self=w_self)
    out_self_f32 = jax.block_until_ready(
        batch_gcn_conv(x, adj, w_neigh, b_neigh, w_self=w_self,
                       compute_dtype=jnp.float32))
    assert jnp.allclose(out_self_f32, ref_self, atol=1e-4, rtol=1e-4)

    # --- default fast path: bf16 streaming with f32 accumulation ------------
    out_bf16 = jax.block_until_ready(batch_gcn_conv(x, adj, w_neigh, b_neigh))
    rel = jnp.max(jnp.abs(out_bf16 - ref_gcn)) / (jnp.max(jnp.abs(ref_gcn)) + 1e-6)
    assert rel < 0.08, rel

    out_self_bf16 = jax.block_until_ready(
        batch_gcn_conv(x, adj, w_neigh, b_neigh, w_self=w_self))
    rel = jnp.max(jnp.abs(out_self_bf16 - ref_self)) / (jnp.max(jnp.abs(ref_self)) + 1e-6)
    assert rel < 0.08, rel

    print("KERNEL_OK")
</pallas_src>

<mosaic_0001>
module attributes {stable_mosaic.version = 11 : i64} {
  func.func @_gcn_row_kernel(%arg0: i32, %arg1: i32, %arg2: memref<1x8x8xf32, #tpu.memory_space<vmem>>, %arg3: memref<1x8x16xf32, #tpu.memory_space<vmem>>, %arg4: memref<16x128xf32, #tpu.memory_space<vmem>>, %arg5: memref<1x128xf32, #tpu.memory_space<vmem>>, %arg6: memref<1x8x128xf32, #tpu.memory_space<vmem>>) attributes {dimension_semantics = [#tpu.dimension_semantics<parallel>, #tpu.dimension_semantics<parallel>], iteration_bounds = array<i64: 2, 1>, scalar_prefetch = 0 : i64, scratch_operands = 0 : i64, tpu.core_type = #tpu.core_type<tc>, window_params = [{transform_indices = @transform_0, window_bounds = array<i64: 1, 8, 8>}, {transform_indices = @transform_1, window_bounds = array<i64: 1, 8, 16>}, {pipeline_mode = #tpu.pipeline_mode<synchronous>, transform_indices = @transform_2, window_bounds = array<i64: 16, 128>}, {pipeline_mode = #tpu.pipeline_mode<synchronous>, transform_indices = @transform_3, window_bounds = array<i64: 1, 128>}, {transform_indices = @transform_4, window_bounds = array<i64: 1, 8, 128>}]} {
    %c0 = arith.constant 0 : index
    %c0_0 = arith.constant 0 : index
    %c0_1 = arith.constant 0 : index
    %0 = vector.load %arg2[%c0, %c0_0, %c0_1] : memref<1x8x8xf32, #tpu.memory_space<vmem>>, vector<1x8x8xf32>
    %1 = vector.shape_cast %0 : vector<1x8x8xf32> to vector<8x8xf32>
    %c0_2 = arith.constant 0 : index
    %c0_3 = arith.constant 0 : index
    %c0_4 = arith.constant 0 : index
    %2 = vector.load %arg3[%c0_2, %c0_3, %c0_4] : memref<1x8x16xf32, #tpu.memory_space<vmem>>, vector<1x8x16xf32>
    %3 = vector.shape_cast %2 : vector<1x8x16xf32> to vector<8x16xf32>
    %cst = arith.constant dense<0.000000e+00> : vector<8x16xf32>
    %4 = tpu.matmul %1, %3, %cst {dimension_numbers = #tpu.dot_dimension_numbers<[1], [0], [0], [1], [0, 0, 1, 1], [], []>} : vector<8x8xf32>, vector<8x16xf32>, vector<8x16xf32> -> vector<8x16xf32>
    %c0_5 = arith.constant 0 : index
    %c0_6 = arith.constant 0 : index
    %5 = vector.load %arg4[%c0_5, %c0_6] : memref<16x128xf32, #tpu.memory_space<vmem>>, vector<16x128xf32>
    %cst_7 = arith.constant dense<0.000000e+00> : vector<8x128xf32>
    %6 = tpu.matmul %4, %5, %cst_7 {dimension_numbers = #tpu.dot_dimension_numbers<[1], [0], [0], [1], [0, 0, 1, 1], [], []>} : vector<8x16xf32>, vector<16x128xf32>, vector<8x128xf32> -> vector<8x128xf32>
    %c0_8 = arith.constant 0 : index
    %c0_9 = arith.constant 0 : index
    %7 = vector.load %arg5[%c0_8, %c0_9] : memref<1x128xf32, #tpu.memory_space<vmem>>, vector<1x128xf32>
    %8 = vector.broadcast %7 : vector<1x128xf32> to vector<8x128xf32>
    %9 = arith.addf %6, %8 : vector<8x128xf32>
    %c0_10 = arith.constant 0 : index
    %c0_11 = arith.constant 0 : index
    %c0_12 = arith.constant 0 : index
    %10 = vector.load %arg6[%c0_10, %c0_11, %c0_12] : memref<1x8x128xf32, #tpu.memory_space<vmem>>, vector<1x8x128xf32>
    %11 = vector.shape_cast %10 : vector<1x8x128xf32> to vector<8x128xf32>
    %12 = vector.shape_cast %9 : vector<8x128xf32> to vector<1x8x128xf32>
    tpu.vector_store %arg6[%c0_10, %c0_11, %c0_12], %12 {strides = array<i32>} : memref<1x8x128xf32, #tpu.memory_space<vmem>>, vector<1x8x128xf32>,
    return
  }
  func.func @transform_0(%arg0: i32, %arg1: i32) -> (i32, i32, i32) {
    %c0_i32 = arith.constant 0 : i32
    %c0_i32_0 = arith.constant 0 : i32
    return %arg0, %arg1, %c0_i32 : i32, i32, i32
  }
  func.func @transform_1(%arg0: i32, %arg1: i32) -> (i32, i32, i32) {
    %c0_i32 = arith.constant 0 : i32
    %c0_i32_0 = arith.constant 0 : i32
    %c0_i32_1 = arith.constant 0 : i32
    return %arg0, %c0_i32, %c0_i32_0 : i32, i32, i32
  }
  func.func @transform_2(%arg0: i32, %arg1: i32) -> (i32, i32) {
    %c0_i32 = arith.constant 0 : i32
    %c0_i32_0 = arith.constant 0 : i32
    %c0_i32_1 = arith.constant 0 : i32
    return %c0_i32, %c0_i32_0 : i32, i32
  }
  func.func @transform_3(%arg0: i32, %arg1: i32) -> (i32, i32) {
    %c0_i32 = arith.constant 0 : i32
    %c0_i32_0 = arith.constant 0 : i32
    %c0_i32_1 = arith.constant 0 : i32
    return %c0_i32, %c0_i32_0 : i32, i32
  }
  func.func @transform_4(%arg0: i32, %arg1: i32) -> (i32, i32, i32) {
    %c0_i32 = arith.constant 0 : i32
    %c0_i32_0 = arith.constant 0 : i32
    return %arg0, %arg1, %c0_i32 : i32, i32, i32
  }
}

</mosaic_0001>

<llo_original>
// kernel: tpu_custom_call.1
$region0: #{tpu_custom_call.1}
  #allocation0 [shape = 'u32[]', space=smem, size = 0x4, offset = 0x4, fixed_abs, tag = 'smem constant byte address 0x4 - core index']
  #allocation1 [shape = 'u32[72,128]{1,0:T(1,128)}', space=vmem, size = 0x9000, scoped, tag = 'internal scratch']
  %s0 = inlined_call_operand.hbm [shape: f32[2,8,8], index: 0, kind: input, shape index: {}]
  %s1 = inlined_call_operand.hbm [shape: f32[2,8,16], index: 1, kind: input, shape index: {}]
  %s2 = inlined_call_operand.hbm [shape: f32[16,128], index: 2, kind: input, shape index: {}]
  %s3 = inlined_call_operand.vmem [shape: f32[1,128], index: 3, kind: input, shape index: {}]
  %s4 = inlined_call_operand.hbm [shape: f32[2,8,128], index: 4, kind: output, shape index: {}]
  %s5 = sld [smem:[#allocation0]]
  $region61: #{tpu_custom_call.1} parent=0
    _
  %s7 = ssub.s32 1, %s5
  %s8 = scalar_select 0, %s7, %s5
  $region1: #{tpu_custom_call.1} parent=0
    #allocation2 [shape = 'u8[8192]{0}', space=vmem, size = 0x2000, scoped, tag = 'input window, operand 0']
    #allocation3 [shape = 's32[2]{0}', space=sflag, size = 0x8, scoped, tag = 'scoped memory for tpu_custom_call.1']
    #allocation4 [shape = 's32[2]{0}', space=sflag, size = 0x8, scoped, tag = 'scoped memory for tpu_custom_call.1']
    #allocation5 [shape = 'u8[8192]{0}', space=vmem, size = 0x2000, scoped, tag = 'input window, operand 1']
    #allocation6 [shape = 's32[2]{0}', space=sflag, size = 0x8, scoped, tag = 'scoped memory for tpu_custom_call.1']
    #allocation7 [shape = 'u8[8192]{0}', space=vmem, size = 0x2000, scoped, tag = 'input window, operand 2, single buffered']
    #allocation8 [shape = 'u8[8192]{0}', space=vmem, size = 0x2000, scoped, tag = 'output window, operand 0']
    %9 = vsyncpa [#allocation3], 0
    %s10 = scalar_lea.sflag [#allocation3], 1
    %11 = vsyncpa %s10, 0
    %12 = vsyncpa [#allocation6], 0
    %s13 = scalar_lea.sflag [#allocation6], 1
    %14 = vsyncpa %s13, 0
    %15 = vsyncpa [#allocation4], 0
    %s16 = scalar_lea.sflag [#allocation4], 1
    %17 = vsyncpa %s16, 0
    loop: start=0, step=1, limit=4
    $region2: #{tpu_custom_call.1} parent=1 // loop_pre_header
      _
    $region3: #{tpu_custom_call.1} parent=1 // loop_header
      %s19 = sphi 0, %s23
      %p20 = scmp.ge.s32.totalorder %s19, 4
      %s26 = sphi 0, %s38
      %s27 = sphi 0, %s34
      %s28 = sphi 0, %s26
      %s29 = sphi 0, %s27
      %s30 = sphi 0, %s28
      %s31 = sphi 0, %s29
      %s43 = sphi 0, %s45
      %s46 = sphi 0, %s43
      %s47 = sphi 0, %s46
      %s63 = sphi 0, %s47
      %s69 = sphi 0, %s71
      %s72 = sphi 0, %s69
      %s73 = sphi 0, %s72
      %s89 = sphi 0, %s73
      %s93 = sphi 0, %s93
      %s95 = sphi 0, %s93
      %s96 = sphi 0, %s95
      %s110 = sphi 0, %s96
      %s114 = sphi 0, %s114
      %s116 = sphi 0, %s114
      %s117 = sphi 0, %s116
      %s131 = sphi 0, %s117
      %s139 = sphi 0, %s141
      %s142 = sphi 0, %s139
      %s143 = sphi 0, %s142
      %s159 = sphi 0, %s143
    $region4: #{tpu_custom_call.1} parent=1 // loop_header_branch
      %22 = sbr.rel (%p20) target = $region8
    $region5: #{tpu_custom_call.1} parent=1 // loop_body
      %s24 = ssub.s32 %s19, 1
      %s25 = ssub.s32 %s19, 2
      %s32 = sadd.s32 1, %s27
      %p33 = scmp.ge.s32.totalorder %s32, 1
      %s34 = scalar_select %p33, 0, %s32
      %s35 = sadd.s32 1, %s26
      %s36 = scalar_select %p33, %s35, %s26
      %p37 = scmp.ge.s32.totalorder %s36, 2
      %s38 = scalar_select %p37, 0, %s36
      %s39 = ssub.s32 %s26, %s38
      %s40 = ssub.s32 %s27, %s34
      %s41 = sor.u32 %s39, %s40
      %p42 = scmp.eq.s32.totalorder %s41, 0
      %s44 = sadd.s32 %s43, 1
      %s45 = scalar_select %p42, %s43, %s44
      %p48 = pneg %p42
      %p49 = scmp.eq.s32.totalorder %s19, 1
      %p50 = por %p48, %p49
      %p51 = scmp.ne.s32.totalorder %s43, %s46
      %p52 = scmp.eq.s32.totalorder %s19, 0
      %p53 = por %p51, %p52
      %p54 = scmp.ne.s32.totalorder %s43, %s46
      %p55 = scmp.eq.s32.totalorder %s24, 1
      %p56 = por %p54, %p55
      %p57 = scmp.ne.s32.totalorder %s46, %s47
      %p58 = scmp.eq.s32.totalorder %s24, 0
      %p59 = por %p57, %p58
      %p60 = scmp.ne.s32.totalorder %s46, %s47
      %p61 = scmp.eq.s32.totalorder %s25, 1
      %p62 = por %p60, %p61
      %p64 = scmp.ne.s32.totalorder %s47, %s63
      %p65 = scmp.eq.s32.totalorder %s25, 0
      %p66 = por %p64, %p65
      %s67 = ssub.s32 %s26, %s38
      %p68 = scmp.eq.s32.totalorder %s67, 0
      %s70 = sadd.s32 %s69, 1
      %s71 = scalar_select %p68, %s69, %s70
      %p74 = pneg %p68
      %p75 = scmp.eq.s32.totalorder %s19, 1
      %p76 = por %p74, %p75
      %p77 = scmp.ne.s32.totalorder %s69, %s72
      %p78 = scmp.eq.s32.totalorder %s19, 0
      %p79 = por %p77, %p78
      %p80 = scmp.ne.s32.totalorder %s69, %s72
      %p81 = scmp.eq.s32.totalorder %s24, 1
      %p82 = por %p80, %p81
      %p83 = scmp.ne.s32.totalorder %s72, %s73
      %p84 = scmp.eq.s32.totalorder %s24, 0
      %p85 = por %p83, %p84
      %p86 = scmp.ne.s32.totalorder %s72, %s73
      %p87 = scmp.eq.s32.totalorder %s25, 1
      %p88 = por %p86, %p87
      %p90 = scmp.ne.s32.totalorder %s73, %s89
      %p91 = scmp.eq.s32.totalorder %s25, 0
      %p92 = por %p90, %p91
      %s94 = sadd.s32 %s93, 1
      %p97 = scmp.eq.s32.totalorder %s19, 1
      %p98 = scmp.ne.s32.totalorder %s93, %s95
      %p99 = scmp.eq.s32.totalorder %s19, 0
      %p100 = por %p98, %p99
      %p101 = scmp.ne.s32.totalorder %s93, %s95
      %p102 = scmp.eq.s32.totalorder %s24, 1
      %p103 = por %p101, %p102
      %p104 = scmp.ne.s32.totalorder %s95, %s96
      %p105 = scmp.eq.s32.totalorder %s24, 0
      %p106 = por %p104, %p105
      %p107 = scmp.ne.s32.totalorder %s95, %s96
      %p108 = scmp.eq.s32.totalorder %s25, 1
      %p109 = por %p107, %p108
      %p111 = scmp.ne.s32.totalorder %s96, %s110
      %p112 = scmp.eq.s32.totalorder %s25, 0
      %p113 = por %p111, %p112
      %s115 = sadd.s32 %s114, 1
      %p118 = scmp.eq.s32.totalorder %s19, 1
      %p119 = scmp.ne.s32.totalorder %s114, %s116
      %p120 = scmp.eq.s32.totalorder %s19, 0
      %p121 = por %p119, %p120
      %p122 = scmp.ne.s32.totalorder %s114, %s116
      %p123 = scmp.eq.s32.totalorder %s24, 1
      %p124 = por %p122, %p123
      %p125 = scmp.ne.s32.totalorder %s116, %s117
      %p126 = scmp.eq.s32.totalorder %s24, 0
      %p127 = por %p125, %p126
      %p128 = scmp.ne.s32.totalorder %s116, %s117
      %p129 = scmp.eq.s32.totalorder %s25, 1
      %p130 = por %p128, %p129
      %p132 = scmp.ne.s32.totalorder %s117, %s131
      %p133 = scmp.eq.s32.totalorder %s25, 0
      %p134 = por %p132, %p133
      %s135 = ssub.s32 %s26, %s38
      %s136 = ssub.s32 %s27, %s34
      %s137 = sor.u32 %s135, %s136
      %p138 = scmp.eq.s32.totalorder %s137, 0
      %s140 = sadd.s32 %s139, 1
      %s141 = scalar_select %p138, %s139, %s140
      %p144 = pneg %p138
      %p145 = scmp.eq.s32.totalorder %s19, 1
      %p146 = por %p144, %p145
      %p147 = scmp.ne.s32.totalorder %s139, %s142
      %p148 = scmp.eq.s32.totalorder %s19, 0
      %p149 = por %p147, %p148
      %p150 = scmp.ne.s32.totalorder %s139, %s142
      %p151 = scmp.eq.s32.totalorder %s24, 1
      %p152 = por %p150, %p151
      %p153 = scmp.ne.s32.totalorder %s142, %s143
      %p154 = scmp.eq.s32.totalorder %s24, 0
      %p155 = por %p153, %p154
      %p156 = scmp.ne.s32.totalorder %s142, %s143
      %p157 = scmp.eq.s32.totalorder %s25, 1
      %p158 = por %p156, %p157
      %p160 = scmp.ne.s32.totalorder %s143, %s159
      %p161 = scmp.eq.s32.totalorder %s25, 0
      %p162 = por %p160, %p161
      %p163 = scmp.le.s32.totalorder 1, %s19
      %p164 = scmp.lt.s32.totalorder %s19, 3
      %p165 = pnand %p163, %p164
      %p166 = pneg %p165
      // Predicated region
      $region9: #{tpu_custom_call.1} parent=5 // pred_check
        _
      $region10: #{tpu_custom_call.1} parent=5 // pred_check_branch
        %168 = sbr.rel (%p165) target = $region12
      $region11: #{tpu_custom_call.1} parent=5 // pred_region
        %s169 = ssub.s32 %s19, 1
        // Predicated region
        $region13: #{tpu_custom_call.1} parent=11 // pred_check
          %p170 = pneg %p106
        $region14: #{tpu_custom_call.1} parent=11 // pred_check_branch
          %172 = sbr.rel (%p170) target = $region16
        $region15: #{tpu_custom_call.1} parent=11 // pred_region
          %174 = vsyncadd [#allocation6], 0
          %s175 = sshll.u32 %s2, 4
          %s176 = int_to_ptr.hbm [resolvable:$true] %s175
          %s177 = sshll.u32 [#allocation7], 4
          %s178 = int_to_ptr.vmem [resolvable:$true] %s177
          %183 = dma.hbm_to_vmem [thread:$0]  %s176, 256, %s178, [#allocation6], 128, 128, 8
        $region16: #{tpu_custom_call.1} parent=11 // pred_fallthru
          _
        // Predicated region
        $region17: #{tpu_custom_call.1} parent=11 // pred_check
          %p184 = pneg %p127
        $region18: #{tpu_custom_call.1} parent=11 // pred_check_branch
          %186 = sbr.rel (%p184) target = $region20
        $region19: #{tpu_custom_call.1} parent=11 // pred_region
          _
        $region20: #{tpu_custom_call.1} parent=11 // pred_fallthru
          _
      $region12: #{tpu_custom_call.1} parent=5 // pred_fallthru
        _
      %p187 = scmp.lt.s32.totalorder %s19, 2
      // Predicated region
      $region21: #{tpu_custom_call.1} parent=5 // pred_check
        %p188 = pneg %p187
      $region22: #{tpu_custom_call.1} parent=5 // pred_check_branch
        %190 = sbr.rel (%p188) target = $region24
      $region23: #{tpu_custom_call.1} parent=5 // pred_region
        // Predicated region
        $region25: #{tpu_custom_call.1} parent=23 // pred_check
          %p191 = pneg %p53
        $region26: #{tpu_custom_call.1} parent=23 // pred_check_branch
          %193 = sbr.rel (%p191) target = $region28
        $region27: #{tpu_custom_call.1} parent=23 // pred_region
          %s194 = sand.u32 %s43, 1
          %s195 = scalar_lea.sflag [#allocation3], %s194
          %s196 = sand.u32 %s43, 1
          %s197 = smul.addr %s196, 8
          %s198 = scalar_lea.vmem [#allocation2], %s197
          %200 = vsyncadd %s195, 0
          %s201 = sadd.s32 %s27, %s26
          %s202 = smul.addr %s201, 8
          %s203 = scalar_lea.hbm %s0, %s202
          %s205 = sshll.u32 %s203, 4
          %s206 = int_to_ptr.hbm [resolvable:$true] %s205
          %s207 = sshll.u32 %s198, 4
          %s208 = int_to_ptr.vmem [resolvable:$true] %s207
          %210 = dma.hbm_to_vmem [thread:$0]  %s206, 128, %s208, %s195
        $region28: #{tpu_custom_call.1} parent=23 // pred_fallthru
          _
        // Predicated region
        $region29: #{tpu_custom_call.1} parent=23 // pred_check
          %p211 = pneg %p79
        $region30: #{tpu_custom_call.1} parent=23 // pred_check_branch
          %213 = sbr.rel (%p211) target = $region32
        $region31: #{tpu_custom_call.1} parent=23 // pred_region
          %s214 = sand.u32 %s19, 1
          %s215 = scalar_lea.sflag [#allocation6], %s214
          %s216 = sand.u32 %s69, 1
          %s217 = smul.addr %s216, 8
          %s218 = scalar_lea.vmem [#allocation5], %s217
          %220 = vsyncadd %s215, 0
          %s221 = smul.addr %s26, 8
          %s222 = scalar_lea.hbm %s1, %s221
          %s224 = sshll.u32 %s222, 4
          %s225 = int_to_ptr.hbm [resolvable:$true] %s224
          %s226 = sshll.u32 %s218, 4
          %s227 = int_to_ptr.vmem [resolvable:$true] %s226
          %229 = dma.hbm_to_vmem [thread:$0]  %s225, 128, %s227, %s215
        $region32: #{tpu_custom_call.1} parent=23 // pred_fallthru
          _
      $region24: #{tpu_custom_call.1} parent=5 // pred_fallthru
        _
      %p230 = scmp.le.s32.totalorder 1, %s19
      %p231 = scmp.lt.s32.totalorder %s19, 3
      %p232 = pnand %p230, %p231
      %p233 = pneg %p232
      // Predicated region
      $region33: #{tpu_custom_call.1} parent=5 // pred_check
        _
      $region34: #{tpu_custom_call.1} parent=5 // pred_check_branch
        %235 = sbr.rel (%p232) target = $region36
      $region35: #{tpu_custom_call.1} parent=5 // pred_region
        %s236 = ssub.s32 %s19, 1
        %s237 = sand.u32 %s46, 1
        %s238 = scalar_lea.sflag [#allocation3], %s237
        %s239 = sand.u32 %s46, 1
        %s240 = smul.addr %s239, 8
        %s241 = scalar_lea.vmem [#allocation2], %s240
        // Predicated region
        $region37: #{tpu_custom_call.1} parent=35 // pred_check
          %p242 = pneg %p59
        $region38: #{tpu_custom_call.1} parent=35 // pred_check_branch
          %244 = sbr.rel (%p242) target = $region40
        $region39: #{tpu_custom_call.1} parent=35 // pred_region
          %246 = dma.done %s238, 128
        $region40: #{tpu_custom_call.1} parent=35 // pred_fallthru
          _
        %s247 = sand.u32 %s24, 1
        %s248 = scalar_lea.sflag [#allocation6], %s247
        %s249 = sand.u32 %s72, 1
        %s250 = smul.addr %s249, 8
        %s251 = scalar_lea.vmem [#allocation5], %s250
        // Predicated region
        $region41: #{tpu_custom_call.1} parent=35 // pred_check
          %p252 = pneg %p85
        $region42: #{tpu_custom_call.1} parent=35 // pred_check_branch
          %254 = sbr.rel (%p252) target = $region44
        $region43: #{tpu_custom_call.1} parent=35 // pred_region
          %256 = dma.done %s248, 128
        $region44: #{tpu_custom_call.1} parent=35 // pred_fallthru
          _
        // Predicated region
        $region45: #{tpu_custom_call.1} parent=35 // pred_check
          %p257 = pneg %p106
        $region46: #{tpu_custom_call.1} parent=35 // pred_check_branch
          %259 = sbr.rel (%p257) target = $region48
        $region47: #{tpu_custom_call.1} parent=35 // pred_region
          %261 = dma.done [#allocation6], 256
        $region48: #{tpu_custom_call.1} parent=35 // pred_fallthru
          _
        %s262 = sand.u32 %s46, 1
        %s263 = scalar_lea.sflag [#allocation3], %s262
        %s264 = sand.u32 %s46, 1
        %s265 = smul.addr %s264, 8
        %s266 = scalar_lea.vmem [#allocation2], %s265
        %p267 = pneg %p59
        %p268 = pneg %p56
        %s269 = sand.u32 %s24, 1
        %s270 = scalar_lea.sflag [#allocation6], %s269
        %s271 = sand.u32 %s72, 1
        %s272 = smul.addr %s271, 8
        %s273 = scalar_lea.vmem [#allocation5], %s272
        %p274 = pneg %p85
        %p275 = pneg %p82
        %p276 = pneg %p106
        %p277 = pneg %p103
        %p278 = pneg %p127
        %p279 = pneg %p124
        %p280 = pneg %p155
        %p281 = pneg %p152
        %s282 = sand.u32 %s142, 1
        %s283 = scalar_lea.sflag [#allocation4], %s282
        %s284 = sand.u32 %s142, 1
        %s285 = smul.addr %s284, 8
        %s286 = scalar_lea.vmem [#allocation8], %s285
        %v287 = vld [vmem:[%s241] sm:$0xff]
        %v288 = vld [vmem:[%s251] sm:$0xff]
        %vm289 = vcmask 64512
        %v291 = vsel %vm289, %v287, 0
        %293 = vmatpush.msra.mxu0 0.0
        %294 = vmatpush.msra.mxu0 0.0
        %295 = vmatpush.msra.mxu0 0.0
        %296 = vmatpush.msra.mxu0 0.0
        %297 = vmatpush.msra.mxu0 0.0
        %298 = vmatpush.msra.mxu0 0.0
        %299 = vmatpush.msra.mxu0 0.0
        %300 = vmatpush.msra.mxu0 0.0
        %301 = vmatpush.msra.mxu0 0.0
        %302 = vmatpush.msra.mxu0 0.0
        %303 = vmatpush.msra.mxu0 0.0
        %304 = vmatpush.msra.mxu0 0.0
        %305 = vmatpush.msra.mxu0 0.0
        %306 = vmatpush.msra.mxu0 0.0
        %307 = vmatpush.msra.mxu0 0.0
        %308 = vmatpush.msra.mxu0 %v288
        %309 = vmatmul.f32.gmra.mxu0 %v291
        %v310 = vpop.f32.mrf.mxu0
        %v311 = vadd.f32 0.0, %v310
        %312 = vdwg.mxu0
        %v313 = vld [vmem:[#allocation7] sm:$0xff]
        %v314 = vld [vmem:[#allocation7 + $0x8] sm:$0xff]
        %v315 = vld [vmem:[%s3] sm:$0x1]
        %v317 = vperm.slane %v315, 0
        %vm319 = vcmask 130048
        %v321 = vsel %vm319, %v311, 0
        %323 = vmatpush.msra.mxu0 0.0
        %324 = vmatpush.msra.mxu0 0.0
        %325 = vmatpush.msra.mxu0 0.0
        %326 = vmatpush.msra.mxu0 0.0
        %327 = vmatpush.msra.mxu0 0.0
        %328 = vmatpush.msra.mxu0 0.0
        %329 = vmatpush.msra.mxu0 0.0
        %330 = vmatpush.msra.mxu0 0.0
        %331 = vmatpush.msra.mxu0 0.0
        %332 = vmatpush.msra.mxu0 0.0
        %333 = vmatpush.msra.mxu0 0.0
        %334 = vmatpush.msra.mxu0 0.0
        %335 = vmatpush.msra.mxu0 0.0
        %336 = vmatpush.msra.mxu0 0.0
        %337 = vmatpush.msra.mxu0 %v314
        %338 = vmatpush.msra.mxu0 %v313
        %339 = vmatmul.f32.gmra.mxu0 %v321
        %v340 = vpop.f32.mrf.mxu0
        %v341 = vadd.f32 %v317, %v340
        %342 = vdwg.mxu0
        %343 = vst [vmem:[%s286] sm:$0xff] %v341
        %s344 = sand.u32 %s142, 1
        %s345 = scalar_lea.sflag [#allocation4], %s344
        %s346 = sand.u32 %s142, 1
        %s347 = smul.addr %s346, 8
        %s348 = scalar_lea.vmem [#allocation8], %s347
        // Predicated region
        $region49: #{tpu_custom_call.1} parent=35 // pred_check
          %p349 = pneg %p152
        $region50: #{tpu_custom_call.1} parent=35 // pred_check_branch
          %351 = sbr.rel (%p349) target = $region52
        $region51: #{tpu_custom_call.1} parent=35 // pred_region
          %353 = vsyncadd %s345, 0
          %s354 = sadd.s32 %s29, %s28
          %s355 = smul.addr %s354, 8
          %s356 = scalar_lea.hbm %s4, %s355
          %s358 = sshll.u32 %s348, 4
          %s359 = int_to_ptr.vmem [resolvable:$true] %s358
          %s360 = sshll.u32 %s356, 4
          %s361 = int_to_ptr.hbm [resolvable:$true] %s360
          %363 = dma.vmem_to_hbm [thread:$0]  %s359, 128, %s361, %s345
        $region52: #{tpu_custom_call.1} parent=35 // pred_fallthru
          _
      $region36: #{tpu_custom_call.1} parent=5 // pred_fallthru
        _
      %p364 = scmp.le.s32.totalorder 2, %s19
      // Predicated region
      $region53: #{tpu_custom_call.1} parent=5 // pred_check
        %p365 = pneg %p364
      $region54: #{tpu_custom_call.1} parent=5 // pred_check_branch
        %367 = sbr.rel (%p365) target = $region56
      $region55: #{tpu_custom_call.1} parent=5 // pred_region
        %s368 = ssub.s32 %s19, 2
        // Predicated region
        $region57: #{tpu_custom_call.1} parent=55 // pred_check
          %p369 = pneg %p158
        $region58: #{tpu_custom_call.1} parent=55 // pred_check_branch
          %371 = sbr.rel (%p369) target = $region60
        $region59: #{tpu_custom_call.1} parent=55 // pred_region
          %s372 = sand.u32 %s143, 1
          %s373 = scalar_lea.sflag [#allocation4], %s372
          %s374 = sand.u32 %s143, 1
          %s375 = smul.addr %s374, 8
          %s376 = scalar_lea.vmem [#allocation8], %s375
          %378 = dma.done %s373, 128
        $region60: #{tpu_custom_call.1} parent=55 // pred_fallthru
          _
      $region56: #{tpu_custom_call.1} parent=5 // pred_fallthru
        _
    $region6: #{tpu_custom_call.1} parent=1 // loop_footer
      %s23 = sadd.s32 1, %s19
    $region7: #{tpu_custom_call.1} parent=1 // loop_footer_branch
      %18 = sbr.rel target = $region3
    $region8: #{tpu_custom_call.1} parent=1 // loop_exit
      _
    %379 = vsyncpa [#allocation3], 1
    %s380 = scalar_lea.sflag [#allocation3], 1
    %381 = vsyncpa %s380, 1
    %382 = vsyncpa [#allocation6], 1
    %s383 = scalar_lea.sflag [#allocation6], 1
    %384 = vsyncpa %s383, 1
    %385 = vsyncpa [#allocation4], 1
    %s386 = scalar_lea.sflag [#allocation4], 1
    %387 = vsyncpa %s386, 1

</llo_original>
